<compile_context>
chip_gen: v5e
topology: v5e:2x2
jax: 0.10.0
libtpu: 0.0.40
codegen_flags: <defaults>
</compile_context>

<pallas_src>
import math

import jax
import jax.numpy as jnp
from jax.experimental import pallas as pl
from jax.experimental.pallas import tpu as pltpu


def _round_up(n: int, m: int) -> int:
    return ((n + m - 1) // m) * m


def _sinusoidal_pos_emb_kernel(x_ref, freqs_ref, o_ref):
    # x_ref:     (TB, 1)            f32  (timesteps column for this tile)
    # freqs_ref: (1, half_dim)      f32  (constant block, reused every step)
    # o_ref:     (TB, 2, half_dim)  f32  (lane-aligned sin / cos planes)
    emb = x_ref[...] * freqs_ref[...]          # (TB, half_dim) VPU broadcast-mul
    o_ref[:, 0, :] = jnp.sin(emb)
    o_ref[:, 1, :] = jnp.cos(emb)


def sinusoidal_pos_emb(
    x: jax.Array, dim: int, theta: float = 10000.0, *, max_block_rows: int = 512
) -> jax.Array:
    """Pallas equivalent of SinusoidalPosEmb(dim, theta)(x) for 1-D x."""
    assert x.ndim == 1, "expects a 1-D tensor of timesteps, like the torch module"
    assert dim % 2 == 0 and dim >= 4, "dim must be even with half_dim > 1"
    half_dim = dim // 2
    b = x.shape[0]

    # freqs[k] = exp(-k * log(theta) / (half_dim - 1)) -- hoisted out of kernel.
    scale = math.log(float(theta)) / (half_dim - 1)
    freqs = jnp.exp(
        -scale * jnp.arange(half_dim, dtype=jnp.float32)
    ).reshape(1, half_dim)

    # Batch tile: large enough to amortize per-step overhead, small enough for
    # double-buffered VMEM even on v7x (2 * TB * dim * 4B output + padded input).
    if b <= max_block_rows:
        tb = _round_up(max(b, 1), 8)
    else:
        tb = max_block_rows
    b_pad = _round_up(b, tb)

    x2d = x.astype(jnp.float32).reshape(b, 1)
    if b_pad != b:
        x2d = jnp.pad(x2d, ((0, b_pad - b), (0, 0)))

    grid = (b_pad // tb,)

    out = pl.pallas_call(
        _sinusoidal_pos_emb_kernel,
        out_shape=jax.ShapeDtypeStruct((b_pad, 2, half_dim), jnp.float32),
        grid=grid,
        in_specs=[
            pl.BlockSpec((tb, 1), lambda i: (i, 0)),            # x tile
            pl.BlockSpec((1, half_dim), lambda i: (0, 0)),      # freqs (constant)
        ],
        out_specs=pl.BlockSpec((tb, 2, half_dim), lambda i: (i, 0, 0)),
        compiler_params=pltpu.CompilerParams(
            dimension_semantics=("parallel",),
        ),
    )(x2d, freqs)

    # (B_pad, 2, half_dim) row-major == (B_pad, dim) with [sin | cos] layout.
    out = out.reshape(b_pad, dim)
    if b_pad != b:
        out = out[:b]
    return out


def _reference(x, dim, theta=10000.0):
    half_dim = dim // 2
    emb = math.log(theta) / (half_dim - 1)
    emb = jnp.exp(jnp.arange(half_dim, dtype=jnp.float32) * -emb)
    emb = x.astype(jnp.float32)[:, None] * emb[None, :]
    return jnp.concatenate([jnp.sin(emb), jnp.cos(emb)], axis=-1)


if __name__ == "__main__":
    key = jax.random.PRNGKey(0)

    # Small, module-consistent shapes: a batch of diffusion timesteps.
    B, DIM = 8, 32
    x = jax.random.uniform(key, (B,), dtype=jnp.float32, minval=0.0, maxval=1000.0)

    out = sinusoidal_pos_emb(x, DIM)
    out = jax.block_until_ready(out)
    ref = _reference(x, DIM)
    assert out.shape == (B, DIM)
    assert jnp.allclose(out, ref, atol=1e-5, rtol=1e-5), "mismatch vs reference"

    # Ragged batch (not a multiple of 8) exercises the padding path.
    B2 = 13
    x2 = jax.random.uniform(
        jax.random.PRNGKey(1), (B2,), dtype=jnp.float32, minval=0.0, maxval=1000.0
    )
    out2 = jax.block_until_ready(sinusoidal_pos_emb(x2, DIM))
    ref2 = _reference(x2, DIM)
    assert out2.shape == (B2, DIM)
    assert jnp.allclose(out2, ref2, atol=1e-5, rtol=1e-5), "mismatch (ragged batch)"

    print("KERNEL_OK")
</pallas_src>

<mosaic_0001>
module attributes {stable_mosaic.version = 11 : i64} {
  func.func @_sinusoidal_pos_emb_kernel(%arg0: i32, %arg1: memref<8x1xf32, #tpu.memory_space<vmem>>, %arg2: memref<1x16xf32, #tpu.memory_space<vmem>>, %arg3: memref<8x2x16xf32, #tpu.memory_space<vmem>>) attributes {dimension_semantics = [#tpu.dimension_semantics<parallel>], iteration_bounds = array<i64: 1>, scalar_prefetch = 0 : i64, scratch_operands = 0 : i64, tpu.core_type = #tpu.core_type<tc>, window_params = [{transform_indices = @transform_0, window_bounds = array<i64: 8, 1>}, {pipeline_mode = #tpu.pipeline_mode<synchronous>, transform_indices = @transform_1, window_bounds = array<i64: 1, 16>}, {transform_indices = @transform_2, window_bounds = array<i64: 8, 2, 16>}]} {
    %c0 = arith.constant 0 : index
    %c0_0 = arith.constant 0 : index
    %0 = vector.load %arg1[%c0, %c0_0] : memref<8x1xf32, #tpu.memory_space<vmem>>, vector<8x1xf32>
    %c0_1 = arith.constant 0 : index
    %c0_2 = arith.constant 0 : index
    %1 = vector.load %arg2[%c0_1, %c0_2] : memref<1x16xf32, #tpu.memory_space<vmem>>, vector<1x16xf32>
    %2 = vector.broadcast %0 : vector<8x1xf32> to vector<8x16xf32>
    %3 = vector.broadcast %1 : vector<1x16xf32> to vector<8x16xf32>
    %4 = arith.mulf %2, %3 : vector<8x16xf32>
    %5 = math.sin %4 : vector<8x16xf32>
    %c0_3 = arith.constant 0 : index
    %c0_4 = arith.constant 0 : index
    %c0_5 = arith.constant 0 : index
    %6 = vector.load %arg3[%c0_3, %c0_4, %c0_5] : memref<8x2x16xf32, #tpu.memory_space<vmem>>, vector<8x1x16xf32>
    %7 = vector.shape_cast %6 : vector<8x1x16xf32> to vector<8x16xf32>
    %8 = vector.shape_cast %5 : vector<8x16xf32> to vector<8x1x16xf32>
    tpu.vector_store %arg3[%c0_3, %c0_4, %c0_5], %8 {strides = array<i32>} : memref<8x2x16xf32, #tpu.memory_space<vmem>>, vector<8x1x16xf32>,
    %9 = math.cos %4 : vector<8x16xf32>
    %c0_6 = arith.constant 0 : index
    %c1 = arith.constant 1 : index
    %c0_7 = arith.constant 0 : index
    %10 = vector.load %arg3[%c0_6, %c1, %c0_7] : memref<8x2x16xf32, #tpu.memory_space<vmem>>, vector<8x1x16xf32>
    %11 = vector.shape_cast %10 : vector<8x1x16xf32> to vector<8x16xf32>
    %12 = vector.shape_cast %9 : vector<8x16xf32> to vector<8x1x16xf32>
    tpu.vector_store %arg3[%c0_6, %c1, %c0_7], %12 {strides = array<i32>} : memref<8x2x16xf32, #tpu.memory_space<vmem>>, vector<8x1x16xf32>,
    return
  }
  func.func @transform_0(%arg0: i32) -> (i32, i32) {
    %c0_i32 = arith.constant 0 : i32
    %c0_i32_0 = arith.constant 0 : i32
    return %arg0, %c0_i32 : i32, i32
  }
  func.func @transform_1(%arg0: i32) -> (i32, i32) {
    %c0_i32 = arith.constant 0 : i32
    %c0_i32_0 = arith.constant 0 : i32
    %c0_i32_1 = arith.constant 0 : i32
    return %c0_i32, %c0_i32_0 : i32, i32
  }
  func.func @transform_2(%arg0: i32) -> (i32, i32, i32) {
    %c0_i32 = arith.constant 0 : i32
    %c0_i32_0 = arith.constant 0 : i32
    %c0_i32_1 = arith.constant 0 : i32
    return %arg0, %c0_i32, %c0_i32_0 : i32, i32, i32
  }
}

</mosaic_0001>

<llo_original>
// kernel: tpu_custom_call.1
$region0: #{tpu_custom_call.1}
  #allocation0 [shape = 'u32[]', space=smem, size = 0x4, offset = 0x4, fixed_abs, tag = 'smem constant byte address 0x4 - core index']
  #allocation1 [shape = 'u32[72,128]{1,0:T(1,128)}', space=vmem, size = 0x9000, scoped, tag = 'internal scratch']
  %s0 = inlined_call_operand.vmem [shape: f32[8,1], index: 0, kind: input, shape index: {}]
  %s1 = inlined_call_operand.vmem [shape: f32[1,16], index: 1, kind: input, shape index: {}]
  %s2 = inlined_call_operand.hbm [shape: f32[8,2,16], index: 2, kind: output, shape index: {}]
  %s3 = sld [smem:[#allocation0]]
  $region18: #{tpu_custom_call.1} parent=0
    _
  %s5 = ssub.s32 1, %s3
  %s6 = scalar_select 0, %s5, %s3
  $region1: #{tpu_custom_call.1} parent=0
    #allocation2 [shape = 'u8[8192]{0}', space=vmem, size = 0x2000, scoped, tag = 'output window, operand 0, single buffered']
    #allocation3 [shape = 's32[1]{0}', space=sflag, size = 0x4, scoped, tag = 'scoped memory for tpu_custom_call.1']
    %7 = vsyncpa [#allocation3], 0
    // Predicated region
    $region2: #{tpu_custom_call.1} parent=1 // pred_check
      _
    $region3: #{tpu_custom_call.1} parent=1 // pred_check_branch
      %9 = sbr.rel (0) target = $region5
    $region4: #{tpu_custom_call.1} parent=1 // pred_region
      _
    $region5: #{tpu_custom_call.1} parent=1 // pred_fallthru
      _
    // Predicated region
    $region6: #{tpu_custom_call.1} parent=1 // pred_check
      _
    $region7: #{tpu_custom_call.1} parent=1 // pred_check_branch
      %11 = sbr.rel (0) target = $region9
    $region8: #{tpu_custom_call.1} parent=1 // pred_region
      _
    $region9: #{tpu_custom_call.1} parent=1 // pred_fallthru
      _
    %v12 = vld [vmem:[%s0] sm:$0xff]
    %v13 = vld [vmem:[%s1] sm:$0x1]
    %15 = vset.pattern.permute.xlu0 0
    %16 = vperm.xlu0 %15, %v12
    %v17 = vpop.permute.xlu0 %16
    %v20 = vperm.slane %v13, 0
    %v22 = vmul.f32 %v17, %v20
    %v23 = vand.u32 2147483647, %v22
    %vm24 = vcmp.le.f32.partialorder %v23, 0.7853982
    %vm25 = vcmp.lt.s32.totalorder %v22, 0
    %v26 = vand.u32 %v22, 2139095040
    %v27 = vshrl.u32 %v26, 23
    %v28 = vsub.s32 %v27, 127
    %v29 = vand.u32 2147483647, %v22
    %v30 = vand.u32 %v29, 8388607
    %v31 = vor.u32 %v30, 8388608
    %v32 = vsub.s32 0, %v31
    %v33 = vadd.s32 %v28, 1
    %vm34 = vcmp.gt.s32.totalorder %v33, 0
    %v35 = vsel %vm34, %v33, 0
    %v36 = vshrl.u32 %v35, 5
    %v37 = vand.u32 %v35, 31
    %v38 = vsub.s32 32, %v37
    %v39 = vshrl.u32 683565275, %v38
    %v40 = vshll.u32 683565275, %v37
    %v41 = vshrl.u32 2475754826, %v38
    %v42 = vor.u32 %v40, %v41
    %v43 = vshll.u32 2475754826, %v37
    %v44 = vshrl.u32 2131351028, %v38
    %v45 = vor.u32 %v43, %v44
    %v46 = vshll.u32 2131351028, %v37
    %v47 = vshrl.u32 2102212464, %v38
    %v48 = vor.u32 %v46, %v47
    %v49 = vshll.u32 2102212464, %v37
    %v50 = vshrl.u32 920167782, %v38
    %v51 = vor.u32 %v49, %v50
    %v52 = vshll.u32 920167782, %v37
    %v53 = vshrl.u32 1326507024, %v38
    %v54 = vor.u32 %v52, %v53
    %vm55 = vcmp.lt.s32.totalorder %v36, 1
    %vm56 = vcmp.lt.s32.totalorder %v36, 2
    %vm57 = vcmp.lt.s32.totalorder %v36, 3
    %vm58 = vcmp.lt.s32.totalorder %v36, 4
    %v59 = vsel %vm55, %v39, %v42
    %v60 = vsel %vm58, %v48, 2102212464
    %v61 = vsel %vm57, %v45, %v60
    %v62 = vsel %vm56, %v59, %v61
    %v63 = vsel %vm55, %v42, %v45
    %v64 = vsel %vm58, %v51, 920167782
    %v65 = vsel %vm57, %v48, %v64
    %v66 = vsel %vm56, %v63, %v65
    %v67 = vsel %vm55, %v45, %v48
    %v68 = vsel %vm58, %v54, 1326507024
    %v69 = vsel %vm57, %v51, %v68
    %v70 = vsel %vm56, %v67, %v69
    %v71 = vshll.u32 %v31, 8
    %v72 = vand.u32 %v71, 65535
    %v73 = vshrl.u32 %v71, 16
    %v74 = vand.u32 %v70, 65535
    %v75 = vshrl.u32 %v70, 16
    %v76 = vmul.u32 %v72, %v74
    %v77 = vmul.u32 %v72, %v75
    %v78 = vmul.u32 %v73, %v74
    %v79 = vmul.u32 %v73, %v75
    %v80 = vshll.u32 %v77, 16
    %v81 = vshrl.u32 %v77, 16
    %v82 = vshll.u32 %v78, 16
    %v83 = vshrl.u32 %v78, 16
    %vm84 = vc.u32 %v76, %v80
    %v85 = vsel %vm84, 1, 0
    %v86 = vadd.s32 %v76, %v80
    %v87 = vadd.s32 %v79, %v85
    %vm88 = vc.u32 %v86, %v82
    %v89 = vsel %vm88, 1, 0
    %v90 = vadd.s32 %v86, %v82
    %v91 = vadd.s32 %v87, %v89
    %v92 = vadd.s32 %v91, %v81
    %v93 = vadd.s32 %v92, %v83
    %v94 = vand.u32 %v71, 65535
    %v95 = vshrl.u32 %v71, 16
    %v96 = vand.u32 %v66, 65535
    %v97 = vshrl.u32 %v66, 16
    %v98 = vmul.u32 %v94, %v96
    %v99 = vmul.u32 %v94, %v97
    %v100 = vmul.u32 %v95, %v96
    %v101 = vmul.u32 %v95, %v97
    %v102 = vshll.u32 %v99, 16
    %v103 = vshrl.u32 %v99, 16
    %v104 = vshll.u32 %v100, 16
    %v105 = vshrl.u32 %v100, 16
    %vm106 = vc.u32 %v98, %v102
    %v107 = vsel %vm106, 1, 0
    %v108 = vadd.s32 %v98, %v102
    %v109 = vadd.s32 %v101, %v107
    %vm110 = vc.u32 %v108, %v104
    %v111 = vsel %vm110, 1, 0
    %v112 = vadd.s32 %v108, %v104
    %v113 = vadd.s32 %v109, %v111
    %v114 = vadd.s32 %v113, %v103
    %v115 = vadd.s32 %v114, %v105
    %v116 = vmul.u32 %v71, %v62
    %v117 = vadd.s32 %v93, %v112
    %vm118 = vc.u32 %v93, %v112
    %v119 = vadd.s32 %v115, 1
    %v120 = vsel %vm118, %v119, %v115
    %v121 = vadd.s32 %v116, %v120
    %v122 = vadd.s32 %v121, 536870912
    %v123 = vshrl.u32 %v122, 30
    %v124 = vshll.u32 %v123, 30
    %v125 = vsub.s32 %v121, %v124
    %vm126 = vcmp.lt.s32.totalorder %v125, 0
    %v127 = vsub.s32 0, %v125
    %v128 = vsel %vm126, %v127, %v125
    %v129 = vclz %v128
    %v130 = vsub.s32 %v129, 2
    %vm131 = vcmp.gt.s32.totalorder 0, %v130
    %v132 = vsel %vm131, 0, %v130
    %v133 = vsub.s32 32, %v132
    %v134 = vshll.u32 %v125, %v132
    %v135 = vshrl.u32 %v117, %v133
    %v136 = vor.u32 %v134, %v135
    %v137 = vsub.s32 4294967266, %v132
    %v138 = vadd.s32 %v137, 127
    %v139 = vshll.u32 %v138, 23
    %v140 = vor.u32 4788187, %v139
    %v141 = vand.u32 2147483647, %v140
    %v143 = vcvt.s32.f32 %v136
    %v144 = vmul.f32 %v143, %v141
    %v145 = vxor.u32 %v144, 2147483648
    %v146 = vsel %vm25, %v145, %v144
    %v147 = vsub.s32 4, %v123
    %v148 = vsel %vm25, %v147, %v123
    %v149 = vsel %vm24, %v22, %v146
    %v150 = vsel %vm24, 0, %v148
    %v151 = vmul.f32 %v149, %v149
    %v152 = vmul.f32 %v151, -0.001358992
    %v153 = vadd.f32 %v152, 0.041655596
    %v154 = vmul.f32 %v151, %v153
    %v155 = vadd.f32 %v154, -0.4999988
    %v156 = vmul.f32 %v151, %v155
    %v157 = vadd.f32 1.0, %v156
    %v158 = vmul.f32 %v149, %v149
    %v159 = vmul.f32 %v158, -0.00019511016
    %v160 = vadd.f32 %v159, 0.008332121
    %v161 = vmul.f32 %v158, %v160
    %v162 = vadd.f32 %v161, -0.16666654
    %v163 = vmul.f32 %v158, %v162
    %v164 = vadd.f32 %v163, 1.0
    %v165 = vmul.f32 %v164, %v149
    %vm166 = vweird.f32 %v22
    %v167 = vadd.s32 %v150, 3
    %v168 = vand.u32 %v167, 3
    %vm169 = vcmp.lt.s32.totalorder %v168, 2
    %vm170 = vcmp.eq.s32.totalorder %v168, 0
    %v171 = vxor.u32 %v165, 2147483648
    %v172 = vsel %vm170, %v157, %v171
    %vm173 = vcmp.eq.s32.totalorder %v168, 2
    %v174 = vxor.u32 %v157, 2147483648
    %v175 = vsel %vm173, %v174, %v165
    %v176 = vsel %vm169, %v172, %v175
    %v177 = vsel %vm166, nan, %v176
    %v179 = vrot.slane %v177, 1
    %v180 = vrot.slane %v177, 2
    %v181 = vrot.slane %v177, 3
    %v182 = vrot.slane %v177, 4
    %v183 = vrot.slane %v177, 5
    %v184 = vrot.slane %v177, 6
    %v185 = vrot.slane %v177, 7
    %vm193 = vcmask 122880
    %194 = vst.msk [vmem:[#allocation2] sm:$0x1] %vm193, %v177
    %195 = vst.msk [vmem:[#allocation2 + $0x2] sm:$0x1] %vm193, %v179
    %196 = vst.msk [vmem:[#allocation2 + $0x4] sm:$0x1] %vm193, %v180
    %197 = vst.msk [vmem:[#allocation2 + $0x6] sm:$0x1] %vm193, %v181
    %198 = vst.msk [vmem:[#allocation2 + $0x8] sm:$0x1] %vm193, %v182
    %199 = vst.msk [vmem:[#allocation2 + $0xa] sm:$0x1] %vm193, %v183
    %200 = vst.msk [vmem:[#allocation2 + $0xc] sm:$0x1] %vm193, %v184
    %201 = vst.msk [vmem:[#allocation2 + $0xe] sm:$0x1] %vm193, %v185
    %v202 = vand.u32 2147483647, %v22
    %vm203 = vcmp.le.f32.partialorder %v202, 0.7853982
    %vm204 = vcmp.lt.s32.totalorder %v22, 0
    %v205 = vand.u32 %v22, 2139095040
    %v206 = vshrl.u32 %v205, 23
    %v207 = vsub.s32 %v206, 127
    %v208 = vand.u32 2147483647, %v22
    %v209 = vand.u32 %v208, 8388607
    %v210 = vor.u32 %v209, 8388608
    %v211 = vsub.s32 0, %v210
    %v212 = vadd.s32 %v207, 1
    %vm213 = vcmp.gt.s32.totalorder %v212, 0
    %v214 = vsel %vm213, %v212, 0
    %v215 = vshrl.u32 %v214, 5
    %v216 = vand.u32 %v214, 31
    %v217 = vsub.s32 32, %v216
    %v218 = vshrl.u32 683565275, %v217
    %v219 = vshll.u32 683565275, %v216
    %v220 = vshrl.u32 2475754826, %v217
    %v221 = vor.u32 %v219, %v220
    %v222 = vshll.u32 2475754826, %v216
    %v223 = vshrl.u32 2131351028, %v217
    %v224 = vor.u32 %v222, %v223
    %v225 = vshll.u32 2131351028, %v216
    %v226 = vshrl.u32 2102212464, %v217
    %v227 = vor.u32 %v225, %v226
    %v228 = vshll.u32 2102212464, %v216
    %v229 = vshrl.u32 920167782, %v217
    %v230 = vor.u32 %v228, %v229
    %v231 = vshll.u32 920167782, %v216
    %v232 = vshrl.u32 1326507024, %v217
    %v233 = vor.u32 %v231, %v232
    %vm234 = vcmp.lt.s32.totalorder %v215, 1
    %vm235 = vcmp.lt.s32.totalorder %v215, 2
    %vm236 = vcmp.lt.s32.totalorder %v215, 3
    %vm237 = vcmp.lt.s32.totalorder %v215, 4
    %v238 = vsel %vm234, %v218, %v221
    %v239 = vsel %vm237, %v227, 2102212464
    %v240 = vsel %vm236, %v224, %v239
    %v241 = vsel %vm235, %v238, %v240
    %v242 = vsel %vm234, %v221, %v224
    %v243 = vsel %vm237, %v230, 920167782
    %v244 = vsel %vm236, %v227, %v243
    %v245 = vsel %vm235, %v242, %v244
    %v246 = vsel %vm234, %v224, %v227
    %v247 = vsel %vm237, %v233, 1326507024
    %v248 = vsel %vm236, %v230, %v247
    %v249 = vsel %vm235, %v246, %v248
    %v250 = vshll.u32 %v210, 8
    %v251 = vand.u32 %v250, 65535
    %v252 = vshrl.u32 %v250, 16
    %v253 = vand.u32 %v249, 65535
    %v254 = vshrl.u32 %v249, 16
    %v255 = vmul.u32 %v251, %v253
    %v256 = vmul.u32 %v251, %v254
    %v257 = vmul.u32 %v252, %v253
    %v258 = vmul.u32 %v252, %v254
    %v259 = vshll.u32 %v256, 16
    %v260 = vshrl.u32 %v256, 16
    %v261 = vshll.u32 %v257, 16
    %v262 = vshrl.u32 %v257, 16
    %vm263 = vc.u32 %v255, %v259
    %v264 = vsel %vm263, 1, 0
    %v265 = vadd.s32 %v255, %v259
    %v266 = vadd.s32 %v258, %v264
    %vm267 = vc.u32 %v265, %v261
    %v268 = vsel %vm267, 1, 0
    %v269 = vadd.s32 %v265, %v261
    %v270 = vadd.s32 %v266, %v268
    %v271 = vadd.s32 %v270, %v260
    %v272 = vadd.s32 %v271, %v262
    %v273 = vand.u32 %v250, 65535
    %v274 = vshrl.u32 %v250, 16
    %v275 = vand.u32 %v245, 65535
    %v276 = vshrl.u32 %v245, 16
    %v277 = vmul.u32 %v273, %v275
    %v278 = vmul.u32 %v273, %v276
    %v279 = vmul.u32 %v274, %v275
    %v280 = vmul.u32 %v274, %v276
    %v281 = vshll.u32 %v278, 16
    %v282 = vshrl.u32 %v278, 16
    %v283 = vshll.u32 %v279, 16
    %v284 = vshrl.u32 %v279, 16
    %vm285 = vc.u32 %v277, %v281
    %v286 = vsel %vm285, 1, 0
    %v287 = vadd.s32 %v277, %v281
    %v288 = vadd.s32 %v280, %v286
    %vm289 = vc.u32 %v287, %v283
    %v290 = vsel %vm289, 1, 0
    %v291 = vadd.s32 %v287, %v283
    %v292 = vadd.s32 %v288, %v290
    %v293 = vadd.s32 %v292, %v282
    %v294 = vadd.s32 %v293, %v284
    %v295 = vmul.u32 %v250, %v241
    %v296 = vadd.s32 %v272, %v291
    %vm297 = vc.u32 %v272, %v291
    %v298 = vadd.s32 %v294, 1
    %v299 = vsel %vm297, %v298, %v294
    %v300 = vadd.s32 %v295, %v299
    %v301 = vadd.s32 %v300, 536870912
    %v302 = vshrl.u32 %v301, 30
    %v303 = vshll.u32 %v302, 30
    %v304 = vsub.s32 %v300, %v303
    %vm305 = vcmp.lt.s32.totalorder %v304, 0
    %v306 = vsub.s32 0, %v304
    %v307 = vsel %vm305, %v306, %v304
    %v308 = vclz %v307
    %v309 = vsub.s32 %v308, 2
    %vm310 = vcmp.gt.s32.totalorder 0, %v309
    %v311 = vsel %vm310, 0, %v309
    %v312 = vsub.s32 32, %v311
    %v313 = vshll.u32 %v304, %v311
    %v314 = vshrl.u32 %v296, %v312
    %v315 = vor.u32 %v313, %v314
    %v316 = vsub.s32 4294967266, %v311
    %v317 = vadd.s32 %v316, 127
    %v318 = vshll.u32 %v317, 23
    %v319 = vor.u32 4788187, %v318
    %v320 = vand.u32 2147483647, %v319
    %v322 = vcvt.s32.f32 %v315
    %v323 = vmul.f32 %v322, %v320
    %v324 = vxor.u32 %v323, 2147483648
    %v325 = vsel %vm204, %v324, %v323
    %v326 = vsub.s32 4, %v302
    %v327 = vsel %vm204, %v326, %v302
    %v328 = vsel %vm203, %v22, %v325
    %v329 = vsel %vm203, 0, %v327
    %v330 = vmul.f32 %v328, %v328
    %v331 = vmul.f32 %v330, -0.001358992
    %v332 = vadd.f32 %v331, 0.041655596
    %v333 = vmul.f32 %v330, %v332
    %v334 = vadd.f32 %v333, -0.4999988
    %v335 = vmul.f32 %v330, %v334
    %v336 = vadd.f32 1.0, %v335
    %v337 = vmul.f32 %v328, %v328
    %v338 = vmul.f32 %v337, -0.00019511016
    %v339 = vadd.f32 %v338, 0.008332121
    %v340 = vmul.f32 %v337, %v339
    %v341 = vadd.f32 %v340, -0.16666654
    %v342 = vmul.f32 %v337, %v341
    %v343 = vadd.f32 %v342, 1.0
    %v344 = vmul.f32 %v343, %v328
    %vm345 = vweird.f32 %v22
    %v346 = vand.u32 %v329, 3
    %vm347 = vcmp.lt.s32.totalorder %v346, 2
    %vm348 = vcmp.eq.s32.totalorder %v346, 0
    %v349 = vxor.u32 %v344, 2147483648
    %v350 = vsel %vm348, %v336, %v349
    %vm351 = vcmp.eq.s32.totalorder %v346, 2
    %v352 = vxor.u32 %v336, 2147483648
    %v353 = vsel %vm351, %v352, %v344
    %v354 = vsel %vm347, %v350, %v353
    %v355 = vsel %vm345, nan, %v354
    %v357 = vrot.slane %v355, 1
    %v358 = vrot.slane %v355, 2
    %v359 = vrot.slane %v355, 3
    %v360 = vrot.slane %v355, 4
    %v361 = vrot.slane %v355, 5
    %v362 = vrot.slane %v355, 6
    %v363 = vrot.slane %v355, 7
    %371 = vst.msk [vmem:[#allocation2 + $0x1] sm:$0x1] %vm193, %v355
    %372 = vst.msk [vmem:[#allocation2 + $0x3] sm:$0x1] %vm193, %v357
    %373 = vst.msk [vmem:[#allocation2 + $0x5] sm:$0x1] %vm193, %v358
    %374 = vst.msk [vmem:[#allocation2 + $0x7] sm:$0x1] %vm193, %v359
    %375 = vst.msk [vmem:[#allocation2 + $0x9] sm:$0x1] %vm193, %v360
    %376 = vst.msk [vmem:[#allocation2 + $0xb] sm:$0x1] %vm193, %v361
    %377 = vst.msk [vmem:[#allocation2 + $0xd] sm:$0x1] %vm193, %v362
    %378 = vst.msk [vmem:[#allocation2 + $0xf] sm:$0x1] %vm193, %v363
    // Predicated region
    $region10: #{tpu_custom_call.1} parent=1 // pred_check
      _
    $region11: #{tpu_custom_call.1} parent=1 // pred_check_branch
      %380 = sbr.rel (0) target = $region13
    $region12: #{tpu_custom_call.1} parent=1 // pred_region
      %382 = vsyncadd [#allocation3], 0
      %s383 = sshll.u32 [#allocation2], 4
      %s384 = int_to_ptr.vmem [resolvable:$true] %s383
      %s385 = sshll.u32 %s2, 4
      %s386 = int_to_ptr.hbm [resolvable:$true] %s385
      %391 = dma.vmem_to_hbm [thread:$0]  %s384, 256, %s386, [#allocation3], 32, 32, 2
    $region13: #{tpu_custom_call.1} parent=1 // pred_fallthru
      _
    // Predicated region
    $region14: #{tpu_custom_call.1} parent=1 // pred_check
      _
    $region15: #{tpu_custom_call.1} parent=1 // pred_check_branch
      %393 = sbr.rel (0) target = $region17
    $region16: #{tpu_custom_call.1} parent=1 // pred_region
      %395 = dma.done [#allocation3], 256
    $region17: #{tpu_custom_call.1} parent=1 // pred_fallthru
      _
    %396 = vsyncpa [#allocation3], 1

</llo_original>
